<compile_context>
chip_gen: v6e
topology: v6e:2x2x1
jax: 0.10.0
libtpu: 0.0.40
codegen_flags: <defaults>
</compile_context>

<pallas_src>
import functools

import jax
import jax.numpy as jnp
import numpy as np
from jax.experimental import pallas as pl
from jax.experimental.pallas import tpu as pltpu

HIDDEN = 128


def _round_up(x, m):
    return ((x + m - 1) // m) * m


def _policy_net_kernel(ob_ref, c_ref, noise_ref, w1a_ref, w1b_ref, b1_ref,
                       w2_ref, b2_ref, w3_ref, b3_ref, act_ref, logp_ref):
    # Layer 1: cat([ob, c]) @ w1 written as a split matmul (no concat needed).
    ob = ob_ref[...].astype(jnp.bfloat16)
    cc = c_ref[...].astype(jnp.bfloat16)
    h1 = (jnp.dot(ob, w1a_ref[...], preferred_element_type=jnp.float32)
          + jnp.dot(cc, w1b_ref[...], preferred_element_type=jnp.float32)
          + b1_ref[...])
    h1 = jnp.maximum(h1, 0.0).astype(jnp.bfloat16)
    # Layer 2: (tb, 128) @ (128, 128) + (1, 128) -> ReLU
    h2 = jnp.dot(h1, w2_ref[...], preferred_element_type=jnp.float32) + b2_ref[...]
    h2 = jnp.maximum(h2, 0.0).astype(jnp.bfloat16)
    # Categorical head: (tb, 128) @ (128, a_dim) + (1, a_dim)
    logits = jnp.dot(h2, w3_ref[...], preferred_element_type=jnp.float32) + b3_ref[...]

    tb, a_dim = logits.shape

    # Numerically stable log-softmax over the (unpadded) action dimension.
    lmax = jnp.max(logits, axis=-1, keepdims=True)
    lse = lmax + jnp.log(jnp.sum(jnp.exp(logits - lmax), axis=-1, keepdims=True))
    logprobs = logits - lse

    # Gumbel-max sampling (noise == 0 => deterministic argmax / mode()).
    scores = logits + noise_ref[...]
    smax = jnp.max(scores, axis=-1, keepdims=True)
    col = jax.lax.broadcasted_iota(jnp.int32, (tb, a_dim), 1)
    # First index attaining the max (matches torch argmax tie-breaking).
    action = jnp.min(jnp.where(scores >= smax, col, a_dim),
                     axis=-1, keepdims=True)                    # (tb, 1) int32
    # Gather log-prob of the chosen action via one-hot multiply-sum.
    logp = jnp.sum(jnp.where(col == action, logprobs, 0.0),
                   axis=-1, keepdims=True)

    act_ref[...] = action.astype(jnp.int32)
    logp_ref[...] = logp.astype(logp_ref.dtype)


@functools.partial(jax.jit, static_argnames=("block_b",))
def _policy_net_pallas(ob, c, noise, w1, b1, w2, b2, w3, b3, block_b=None):
    """ob:(B,s_dim) f32, c:(B,c_dim) f32, noise:(B,a_dim) f32 -> ((B,) i32, (B,1) f32)."""
    B, s_dim = ob.shape
    c_dim = c.shape[1]
    a_dim = w3.shape[1]

    if block_b is None:
        if B <= 256:
            block_b = _round_up(B, 8)                 # tiny batch: no over-compute
        else:
            # large batch: >= 2 grid steps so both v7x TensorCores get work
            block_b = min(1024, _round_up((B + 1) // 2, 256))
    nb = pl.cdiv(B, block_b)

    # bf16 weights for the MXU (f32 accumulation in-kernel); biases stay f32.
    w1a = w1[:s_dim].astype(jnp.bfloat16)
    w1b = w1[s_dim:].astype(jnp.bfloat16)
    w2b = w2.astype(jnp.bfloat16)
    w3b = w3.astype(jnp.bfloat16)

    full = lambda shape: pl.BlockSpec(shape, lambda i: tuple(0 for _ in shape))

    act, logp = pl.pallas_call(
        _policy_net_kernel,
        out_shape=(jax.ShapeDtypeStruct((B, 1), jnp.int32),
                   jax.ShapeDtypeStruct((B, 1), jnp.float32)),
        grid_spec=pltpu.PrefetchScalarGridSpec(
            num_scalar_prefetch=0,
            grid=(nb,),
            in_specs=[
                pl.BlockSpec((block_b, s_dim), lambda i: (i, 0)),   # ob tile
                pl.BlockSpec((block_b, c_dim), lambda i: (i, 0)),   # c tile
                pl.BlockSpec((block_b, a_dim), lambda i: (i, 0)),   # gumbel noise
                full((s_dim, HIDDEN)),                              # w1[:s_dim] (resident)
                full((c_dim, HIDDEN)),                              # w1[s_dim:]
                full((1, HIDDEN)),                                  # b1
                full((HIDDEN, HIDDEN)),                             # w2
                full((1, HIDDEN)),                                  # b2
                full((HIDDEN, a_dim)),                              # w3
                full((1, a_dim)),                                   # b3
            ],
            out_specs=[
                pl.BlockSpec((block_b, 1), lambda i: (i, 0)),       # action
                pl.BlockSpec((block_b, 1), lambda i: (i, 0)),       # log_prob
            ],
        ),
        compiler_params=pltpu.CompilerParams(
            dimension_semantics=("parallel",),
            vmem_limit_bytes=32 * 1024 * 1024),
    )(ob, c, noise, w1a, w1b, b1, w2b, b2, w3b, b3)

    return act[:, 0], logp


def policy_net_forward(ob, c, params, key=None, deterministic=False,
                       block_b=None):
    """PolicyNet.forward (discrete / conti=False). Returns (action, log_probs)."""
    w1, b1, w2, b2, w3, b3 = params
    ob = ob.astype(jnp.float32)
    c = c.astype(jnp.float32)
    a_dim = w3.shape[1]
    if deterministic:
        noise = jnp.zeros((ob.shape[0], a_dim), jnp.float32)
    else:
        assert key is not None, "sampling requires a PRNG key"
        noise = jax.random.gumbel(key, (ob.shape[0], a_dim), dtype=jnp.float32)
    return _policy_net_pallas(ob, c, noise, w1, b1, w2, b2, w3, b3,
                              block_b=block_b)


def _orthogonal(key, shape, gain):
    """Deterministic orthogonal init (matches nn.init.orthogonal_ semantics)."""
    rows, cols = shape
    flat = jax.random.normal(key, (max(rows, cols), min(rows, cols)),
                             dtype=jnp.float32)
    q, r = jnp.linalg.qr(flat)
    q = q * jnp.sign(jnp.diag(r))
    if rows < cols:
        q = q.T
    return gain * q[:rows, :cols]


def init_params(key, s_dim, c_dim, a_dim):
    in_dim = s_dim + c_dim
    relu_gain = float(np.sqrt(2.0))  # nn.init.calculate_gain('relu')
    k1, k2, k3 = jax.random.split(key, 3)
    # Stored as (in, out): transpose of PyTorch's (out, in).
    w1 = _orthogonal(k1, (HIDDEN, in_dim), relu_gain).T
    b1 = jnp.zeros((1, HIDDEN), jnp.float32)
    w2 = _orthogonal(k2, (HIDDEN, HIDDEN), relu_gain).T
    b2 = jnp.zeros((1, HIDDEN), jnp.float32)
    # Categorical head uses gain=0.01 in the reference implementation.
    w3 = _orthogonal(k3, (a_dim, HIDDEN), 0.01).T
    b3 = jnp.zeros((1, a_dim), jnp.float32)
    return (w1, b1, w2, b2, w3, b3)


def _ref_logits(ob, c, params):
    """Reference logits with the same bf16-matmul / f32-accumulate numerics."""
    w1, b1, w2, b2, w3, b3 = params
    bf = jnp.bfloat16
    x = jnp.concatenate([ob, c], axis=1)
    h = jnp.maximum(jnp.dot(x.astype(bf), w1.astype(bf),
                            preferred_element_type=jnp.float32) + b1, 0.0)
    h = jnp.maximum(jnp.dot(h.astype(bf), w2.astype(bf),
                            preferred_element_type=jnp.float32) + b2, 0.0)
    return jnp.dot(h.astype(bf), w3.astype(bf),
                   preferred_element_type=jnp.float32) + b3


def _check(act, logp, ob, c, params, noise, a_dim, tol=2e-3):
    """Robust reference check (tolerant to fp-level argmax tie differences)."""
    logits = np.asarray(_ref_logits(ob, c, params), np.float32)
    logprobs = np.asarray(jax.nn.log_softmax(jnp.asarray(logits), axis=-1))
    scores = logits + np.asarray(noise)
    act = np.asarray(act)
    logp = np.asarray(logp)
    assert act.shape == (ob.shape[0],) and logp.shape == (ob.shape[0], 1)
    assert act.min() >= 0 and act.max() < a_dim
    # The chosen action must attain the max score (argmax up to fp tolerance).
    picked = np.take_along_axis(scores, act[:, None], axis=1)[:, 0]
    np.testing.assert_allclose(picked, scores.max(axis=1), rtol=tol, atol=tol)
    # Reported log-prob must equal the reference log-softmax at that action.
    ref_lp = np.take_along_axis(logprobs, act[:, None], axis=1)
    np.testing.assert_allclose(logp, ref_lp, rtol=tol, atol=tol)


if __name__ == "__main__":
    key = jax.random.PRNGKey(0)
    k_ob, k_c, k_p, k_s = jax.random.split(key, 4)
    s_dim, c_dim, a_dim = 12, 4, 6
    batch = 8

    ob = jax.random.normal(k_ob, (batch, s_dim), dtype=jnp.float32)
    c = jax.random.normal(k_c, (batch, c_dim), dtype=jnp.float32)
    params = init_params(k_p, s_dim, c_dim, a_dim)

    # Deterministic path (dist.mode()).
    act_d, logp_d = policy_net_forward(ob, c, params, deterministic=True)
    act_d, logp_d = jax.block_until_ready((act_d, logp_d))
    _check(act_d, logp_d, ob, c, params,
           np.zeros((batch, a_dim), np.float32), a_dim)

    # Sampling path (Gumbel-max; same noise reproduced for the reference).
    act_s, logp_s = policy_net_forward(ob, c, params, key=k_s,
                                       deterministic=False)
    act_s, logp_s = jax.block_until_ready((act_s, logp_s))
    noise = jax.random.gumbel(k_s, (batch, a_dim), dtype=jnp.float32)
    _check(act_s, logp_s, ob, c, params, noise, a_dim)
    assert act_d.shape == (batch,) and logp_d.shape == (batch, 1)

    # Larger batch that does not divide the block size: exercises the
    # multi-step grid and the masked partial trailing block.
    batch2 = 300
    k_ob2, k_c2, k_s2 = jax.random.split(jax.random.PRNGKey(1), 3)
    ob2 = jax.random.normal(k_ob2, (batch2, s_dim), dtype=jnp.float32)
    c2 = jax.random.normal(k_c2, (batch2, c_dim), dtype=jnp.float32)
    act2, logp2 = policy_net_forward(ob2, c2, params, key=k_s2,
                                     deterministic=False)
    act2, logp2 = jax.block_until_ready((act2, logp2))
    noise2 = jax.random.gumbel(k_s2, (batch2, a_dim), dtype=jnp.float32)
    _check(act2, logp2, ob2, c2, params, noise2, a_dim)

    print("KERNEL_OK")
</pallas_src>

<mosaic_0001>
module attributes {stable_mosaic.version = 11 : i64} {
  func.func @_policy_net_kernel(%arg0: i32, %arg1: memref<8x12xf32, #tpu.memory_space<vmem>>, %arg2: memref<8x4xf32, #tpu.memory_space<vmem>>, %arg3: memref<8x6xf32, #tpu.memory_space<vmem>>, %arg4: memref<12x128xbf16, #tpu.memory_space<vmem>>, %arg5: memref<4x128xbf16, #tpu.memory_space<vmem>>, %arg6: memref<1x128xf32, #tpu.memory_space<vmem>>, %arg7: memref<128x128xbf16, #tpu.memory_space<vmem>>, %arg8: memref<1x128xf32, #tpu.memory_space<vmem>>, %arg9: memref<128x6xbf16, #tpu.memory_space<vmem>>, %arg10: memref<1x6xf32, #tpu.memory_space<vmem>>, %arg11: memref<8x1xi32, #tpu.memory_space<vmem>>, %arg12: memref<8x1xf32, #tpu.memory_space<vmem>>) attributes {dimension_semantics = [#tpu.dimension_semantics<parallel>], iteration_bounds = array<i64: 1>, scalar_prefetch = 0 : i64, scratch_operands = 0 : i64, tpu.core_type = #tpu.core_type<tc>, window_params = [{transform_indices = @transform_0, window_bounds = array<i64: 8, 12>}, {transform_indices = @transform_1, window_bounds = array<i64: 8, 4>}, {transform_indices = @transform_2, window_bounds = array<i64: 8, 6>}, {pipeline_mode = #tpu.pipeline_mode<synchronous>, transform_indices = @transform_3, window_bounds = array<i64: 12, 128>}, {pipeline_mode = #tpu.pipeline_mode<synchronous>, transform_indices = @transform_4, window_bounds = array<i64: 4, 128>}, {pipeline_mode = #tpu.pipeline_mode<synchronous>, transform_indices = @transform_5, window_bounds = array<i64: 1, 128>}, {pipeline_mode = #tpu.pipeline_mode<synchronous>, transform_indices = @transform_6, window_bounds = array<i64: 128, 128>}, {pipeline_mode = #tpu.pipeline_mode<synchronous>, transform_indices = @transform_7, window_bounds = array<i64: 1, 128>}, {pipeline_mode = #tpu.pipeline_mode<synchronous>, transform_indices = @transform_8, window_bounds = array<i64: 128, 6>}, {pipeline_mode = #tpu.pipeline_mode<synchronous>, transform_indices = @transform_9, window_bounds = array<i64: 1, 6>}, {transform_indices = @transform_10, window_bounds = array<i64: 8, 1>}, {transform_indices = @transform_11, window_bounds = array<i64: 8, 1>}]} {
    %c0 = arith.constant 0 : index
    %c0_0 = arith.constant 0 : index
    %0 = vector.load %arg1[%c0, %c0_0] : memref<8x12xf32, #tpu.memory_space<vmem>>, vector<8x12xf32>
    %1 = arith.truncf %0 : vector<8x12xf32> to vector<8x12xbf16>
    %c0_1 = arith.constant 0 : index
    %c0_2 = arith.constant 0 : index
    %2 = vector.load %arg2[%c0_1, %c0_2] : memref<8x4xf32, #tpu.memory_space<vmem>>, vector<8x4xf32>
    %3 = arith.truncf %2 : vector<8x4xf32> to vector<8x4xbf16>
    %c0_3 = arith.constant 0 : index
    %c0_4 = arith.constant 0 : index
    %4 = vector.load %arg4[%c0_3, %c0_4] : memref<12x128xbf16, #tpu.memory_space<vmem>>, vector<12x128xbf16>
    %cst = arith.constant dense<0.000000e+00> : vector<8x128xf32>
    %5 = tpu.matmul %1, %4, %cst {dimension_numbers = #tpu.dot_dimension_numbers<[1], [0], [0], [1], [0, 0, 1, 1], [], []>} : vector<8x12xbf16>, vector<12x128xbf16>, vector<8x128xf32> -> vector<8x128xf32>
    %c0_5 = arith.constant 0 : index
    %c0_6 = arith.constant 0 : index
    %6 = vector.load %arg5[%c0_5, %c0_6] : memref<4x128xbf16, #tpu.memory_space<vmem>>, vector<4x128xbf16>
    %cst_7 = arith.constant dense<0.000000e+00> : vector<8x128xf32>
    %7 = tpu.matmul %3, %6, %cst_7 {dimension_numbers = #tpu.dot_dimension_numbers<[1], [0], [0], [1], [0, 0, 1, 1], [], []>} : vector<8x4xbf16>, vector<4x128xbf16>, vector<8x128xf32> -> vector<8x128xf32>
    %8 = arith.addf %5, %7 : vector<8x128xf32>
    %c0_8 = arith.constant 0 : index
    %c0_9 = arith.constant 0 : index
    %9 = vector.load %arg6[%c0_8, %c0_9] : memref<1x128xf32, #tpu.memory_space<vmem>>, vector<1x128xf32>
    %10 = vector.broadcast %9 : vector<1x128xf32> to vector<8x128xf32>
    %11 = arith.addf %8, %10 : vector<8x128xf32>
    %cst_10 = arith.constant 0.000000e+00 : f32
    %12 = vector.broadcast %cst_10 : f32 to vector<8x128xf32>
    %13 = arith.maximumf %11, %12 : vector<8x128xf32>
    %14 = arith.truncf %13 : vector<8x128xf32> to vector<8x128xbf16>
    %c0_11 = arith.constant 0 : index
    %c0_12 = arith.constant 0 : index
    %15 = vector.load %arg7[%c0_11, %c0_12] : memref<128x128xbf16, #tpu.memory_space<vmem>>, vector<128x128xbf16>
    %cst_13 = arith.constant dense<0.000000e+00> : vector<8x128xf32>
    %16 = tpu.matmul %14, %15, %cst_13 {dimension_numbers = #tpu.dot_dimension_numbers<[1], [0], [0], [1], [0, 0, 1, 1], [], []>} : vector<8x128xbf16>, vector<128x128xbf16>, vector<8x128xf32> -> vector<8x128xf32>
    %c0_14 = arith.constant 0 : index
    %c0_15 = arith.constant 0 : index
    %17 = vector.load %arg8[%c0_14, %c0_15] : memref<1x128xf32, #tpu.memory_space<vmem>>, vector<1x128xf32>
    %18 = vector.broadcast %17 : vector<1x128xf32> to vector<8x128xf32>
    %19 = arith.addf %16, %18 : vector<8x128xf32>
    %cst_16 = arith.constant 0.000000e+00 : f32
    %20 = vector.broadcast %cst_16 : f32 to vector<8x128xf32>
    %21 = arith.maximumf %19, %20 : vector<8x128xf32>
    %22 = arith.truncf %21 : vector<8x128xf32> to vector<8x128xbf16>
    %c0_17 = arith.constant 0 : index
    %c0_18 = arith.constant 0 : index
    %23 = vector.load %arg9[%c0_17, %c0_18] : memref<128x6xbf16, #tpu.memory_space<vmem>>, vector<128x6xbf16>
    %cst_19 = arith.constant dense<0.000000e+00> : vector<8x6xf32>
    %24 = tpu.matmul %22, %23, %cst_19 {dimension_numbers = #tpu.dot_dimension_numbers<[1], [0], [0], [1], [0, 0, 1, 1], [], []>} : vector<8x128xbf16>, vector<128x6xbf16>, vector<8x6xf32> -> vector<8x6xf32>
    %c0_20 = arith.constant 0 : index
    %c0_21 = arith.constant 0 : index
    %25 = vector.load %arg10[%c0_20, %c0_21] : memref<1x6xf32, #tpu.memory_space<vmem>>, vector<1x6xf32>
    %26 = vector.broadcast %25 : vector<1x6xf32> to vector<8x6xf32>
    %27 = arith.addf %24, %26 : vector<8x6xf32>
    %cst_22 = arith.constant dense<0xFF800000> : vector<8xf32>
    %28 = vector.multi_reduction <maximumf>, %27, %cst_22 [1] : vector<8x6xf32> to vector<8xf32>
    %29 = vector.shape_cast %28 : vector<8xf32> to vector<8x1xf32>
    %30 = vector.broadcast %29 : vector<8x1xf32> to vector<8x6xf32>
    %31 = arith.subf %27, %30 : vector<8x6xf32>
    %32 = math.exp %31 : vector<8x6xf32>
    %cst_23 = arith.constant dense<0.000000e+00> : vector<8xf32>
    %33 = vector.multi_reduction <add>, %32, %cst_23 [1] : vector<8x6xf32> to vector<8xf32>
    %34 = vector.shape_cast %33 : vector<8xf32> to vector<8x1xf32>
    %35 = math.log %34 : vector<8x1xf32>
    %36 = arith.addf %29, %35 : vector<8x1xf32>
    %37 = vector.broadcast %36 : vector<8x1xf32> to vector<8x6xf32>
    %38 = arith.subf %27, %37 : vector<8x6xf32>
    %c0_24 = arith.constant 0 : index
    %c0_25 = arith.constant 0 : index
    %39 = vector.load %arg3[%c0_24, %c0_25] : memref<8x6xf32, #tpu.memory_space<vmem>>, vector<8x6xf32>
    %40 = arith.addf %27, %39 : vector<8x6xf32>
    %cst_26 = arith.constant dense<0xFF800000> : vector<8xf32>
    %41 = vector.multi_reduction <maximumf>, %40, %cst_26 [1] : vector<8x6xf32> to vector<8xf32>
    %42 = vector.shape_cast %41 : vector<8xf32> to vector<8x1xf32>
    %43 = tpu.iota {dimensions = array<i32: 1>} : vector<8x6xi32>
    %44 = vector.broadcast %42 : vector<8x1xf32> to vector<8x6xf32>
    %45 = arith.cmpf oge, %40, %44 : vector<8x6xf32>
    %c6_i32 = arith.constant 6 : i32
    %46 = vector.broadcast %c6_i32 : i32 to vector<8x6xi32>
    %47 = arith.select %45, %43, %46 : vector<8x6xi1>, vector<8x6xi32>
    %cst_27 = arith.constant dense<2147483647> : vector<8xi32>
    %48 = vector.multi_reduction <minsi>, %47, %cst_27 [1] : vector<8x6xi32> to vector<8xi32>
    %49 = vector.shape_cast %48 : vector<8xi32> to vector<8x1xi32>
    %50 = vector.broadcast %49 : vector<8x1xi32> to vector<8x6xi32>
    %51 = arith.cmpi eq, %43, %50 : vector<8x6xi32>
    %cst_28 = arith.constant 0.000000e+00 : f32
    %52 = vector.broadcast %cst_28 : f32 to vector<8x6xf32>
    %53 = arith.select %51, %38, %52 : vector<8x6xi1>, vector<8x6xf32>
    %cst_29 = arith.constant dense<0.000000e+00> : vector<8xf32>
    %54 = vector.multi_reduction <add>, %53, %cst_29 [1] : vector<8x6xf32> to vector<8xf32>
    %55 = vector.shape_cast %54 : vector<8xf32> to vector<8x1xf32>
    %c0_30 = arith.constant 0 : index
    %c0_31 = arith.constant 0 : index
    %56 = vector.load %arg11[%c0_30, %c0_31] : memref<8x1xi32, #tpu.memory_space<vmem>>, vector<8x1xi32>
    tpu.vector_store %arg11[%c0_30, %c0_31], %49 {strides = array<i32>} : memref<8x1xi32, #tpu.memory_space<vmem>>, vector<8x1xi32>,
    %c0_32 = arith.constant 0 : index
    %c0_33 = arith.constant 0 : index
    %57 = vector.load %arg12[%c0_32, %c0_33] : memref<8x1xf32, #tpu.memory_space<vmem>>, vector<8x1xf32>
    tpu.vector_store %arg12[%c0_32, %c0_33], %55 {strides = array<i32>} : memref<8x1xf32, #tpu.memory_space<vmem>>, vector<8x1xf32>,
    return
  }
  func.func @transform_0(%arg0: i32) -> (i32, i32) {
    %c0_i32 = arith.constant 0 : i32
    %c0_i32_0 = arith.constant 0 : i32
    return %arg0, %c0_i32 : i32, i32
  }
  func.func @transform_1(%arg0: i32) -> (i32, i32) {
    %c0_i32 = arith.constant 0 : i32
    %c0_i32_0 = arith.constant 0 : i32
    return %arg0, %c0_i32 : i32, i32
  }
  func.func @transform_2(%arg0: i32) -> (i32, i32) {
    %c0_i32 = arith.constant 0 : i32
    %c0_i32_0 = arith.constant 0 : i32
    return %arg0, %c0_i32 : i32, i32
  }
  func.func @transform_3(%arg0: i32) -> (i32, i32) {
    %c0_i32 = arith.constant 0 : i32
    %c0_i32_0 = arith.constant 0 : i32
    %c0_i32_1 = arith.constant 0 : i32
    return %c0_i32, %c0_i32_0 : i32, i32
  }
  func.func @transform_4(%arg0: i32) -> (i32, i32) {
    %c0_i32 = arith.constant 0 : i32
    %c0_i32_0 = arith.constant 0 : i32
    %c0_i32_1 = arith.constant 0 : i32
    return %c0_i32, %c0_i32_0 : i32, i32
  }
  func.func @transform_5(%arg0: i32) -> (i32, i32) {
    %c0_i32 = arith.constant 0 : i32
    %c0_i32_0 = arith.constant 0 : i32
    %c0_i32_1 = arith.constant 0 : i32
    return %c0_i32, %c0_i32_0 : i32, i32
  }
  func.func @transform_6(%arg0: i32) -> (i32, i32) {
    %c0_i32 = arith.constant 0 : i32
    %c0_i32_0 = arith.constant 0 : i32
    %c0_i32_1 = arith.constant 0 : i32
    return %c0_i32, %c0_i32_0 : i32, i32
  }
  func.func @transform_7(%arg0: i32) -> (i32, i32) {
    %c0_i32 = arith.constant 0 : i32
    %c0_i32_0 = arith.constant 0 : i32
    %c0_i32_1 = arith.constant 0 : i32
    return %c0_i32, %c0_i32_0 : i32, i32
  }
  func.func @transform_8(%arg0: i32) -> (i32, i32) {
    %c0_i32 = arith.constant 0 : i32
    %c0_i32_0 = arith.constant 0 : i32
    %c0_i32_1 = arith.constant 0 : i32
    return %c0_i32, %c0_i32_0 : i32, i32
  }
  func.func @transform_9(%arg0: i32) -> (i32, i32) {
    %c0_i32 = arith.constant 0 : i32
    %c0_i32_0 = arith.constant 0 : i32
    %c0_i32_1 = arith.constant 0 : i32
    return %c0_i32, %c0_i32_0 : i32, i32
  }
  func.func @transform_10(%arg0: i32) -> (i32, i32) {
    %c0_i32 = arith.constant 0 : i32
    %c0_i32_0 = arith.constant 0 : i32
    return %arg0, %c0_i32 : i32, i32
  }
  func.func @transform_11(%arg0: i32) -> (i32, i32) {
    %c0_i32 = arith.constant 0 : i32
    %c0_i32_0 = arith.constant 0 : i32
    return %arg0, %c0_i32 : i32, i32
  }
}

</mosaic_0001>

<llo_original>
// kernel: _policy_net_pallas.1
$region0: #{_policy_net_pallas.1}
  #allocation0 [shape = 'u32[]', space=smem, size = 0x4, offset = 0x4, fixed_abs, tag = 'smem constant byte address 0x4 - core index']
  #allocation1 [shape = 'u32[144,128]{1,0:T(1,128)}', space=vmem, size = 0x12000, scoped, tag = 'internal scratch']
  %s0 = inlined_call_operand.vmem [shape: f32[8,12], index: 0, kind: input, shape index: {}]
  %s1 = inlined_call_operand.vmem [shape: f32[8,4], index: 1, kind: input, shape index: {}]
  %s2 = inlined_call_operand.vmem [shape: f32[8,6], index: 2, kind: input, shape index: {}]
  %s3 = inlined_call_operand.vmem [shape: bf16[12,128], index: 3, kind: input, shape index: {}]
  %s4 = inlined_call_operand.vmem [shape: bf16[4,128], index: 4, kind: input, shape index: {}]
  %s5 = inlined_call_operand.vmem [shape: f32[1,128], index: 5, kind: input, shape index: {}]
  %s6 = inlined_call_operand.vmem [shape: bf16[128,128], index: 6, kind: input, shape index: {}]
  %s7 = inlined_call_operand.vmem [shape: f32[1,128], index: 7, kind: input, shape index: {}]
  %s8 = inlined_call_operand.vmem [shape: bf16[128,6], index: 8, kind: input, shape index: {}]
  %s9 = inlined_call_operand.vmem [shape: f32[1,6], index: 9, kind: input, shape index: {}]
  %s10 = inlined_call_operand.vmem [shape: s32[8,1], index: 10, kind: output, shape index: {0}]
  %s11 = inlined_call_operand.vmem [shape: f32[8,1], index: 11, kind: output, shape index: {1}]
  %12 = xla_tuple %s10, %s11
  %s13 = sld [smem:[#allocation0]]
  $region58: #{_policy_net_pallas.1} parent=0
    _
  %s15 = ssub.s32 1, %s13
  %s16 = scalar_select 0, %s15, %s13
  // Predicated region
  $region2: #{_policy_net_pallas.1} parent=0 // pred_check
    _
  $region3: #{_policy_net_pallas.1} parent=0 // pred_check_branch
    %18 = sbr.rel (0) target = $region5
  $region4: #{_policy_net_pallas.1} parent=0 // pred_region
    _
  $region5: #{_policy_net_pallas.1} parent=0 // pred_fallthru
    _
  // Predicated region
  $region6: #{_policy_net_pallas.1} parent=0 // pred_check
    _
  $region7: #{_policy_net_pallas.1} parent=0 // pred_check_branch
    %20 = sbr.rel (0) target = $region9
  $region8: #{_policy_net_pallas.1} parent=0 // pred_region
    _
  $region9: #{_policy_net_pallas.1} parent=0 // pred_fallthru
    _
  // Predicated region
  $region10: #{_policy_net_pallas.1} parent=0 // pred_check
    _
  $region11: #{_policy_net_pallas.1} parent=0 // pred_check_branch
    %22 = sbr.rel (0) target = $region13
  $region12: #{_policy_net_pallas.1} parent=0 // pred_region
    _
  $region13: #{_policy_net_pallas.1} parent=0 // pred_fallthru
    _
  // Predicated region
  $region14: #{_policy_net_pallas.1} parent=0 // pred_check
    _
  $region15: #{_policy_net_pallas.1} parent=0 // pred_check_branch
    %24 = sbr.rel (0) target = $region17
  $region16: #{_policy_net_pallas.1} parent=0 // pred_region
    _
  $region17: #{_policy_net_pallas.1} parent=0 // pred_fallthru
    _
  // Predicated region
  $region18: #{_policy_net_pallas.1} parent=0 // pred_check
    _
  $region19: #{_policy_net_pallas.1} parent=0 // pred_check_branch
    %26 = sbr.rel (0) target = $region21
  $region20: #{_policy_net_pallas.1} parent=0 // pred_region
    _
  $region21: #{_policy_net_pallas.1} parent=0 // pred_fallthru
    _
  // Predicated region
  $region22: #{_policy_net_pallas.1} parent=0 // pred_check
    _
  $region23: #{_policy_net_pallas.1} parent=0 // pred_check_branch
    %28 = sbr.rel (0) target = $region25
  $region24: #{_policy_net_pallas.1} parent=0 // pred_region
    _
  $region25: #{_policy_net_pallas.1} parent=0 // pred_fallthru
    _
  // Predicated region
  $region26: #{_policy_net_pallas.1} parent=0 // pred_check
    _
  $region27: #{_policy_net_pallas.1} parent=0 // pred_check_branch
    %30 = sbr.rel (0) target = $region29
  $region28: #{_policy_net_pallas.1} parent=0 // pred_region
    _
  $region29: #{_policy_net_pallas.1} parent=0 // pred_fallthru
    _
  // Predicated region
  $region30: #{_policy_net_pallas.1} parent=0 // pred_check
    _
  $region31: #{_policy_net_pallas.1} parent=0 // pred_check_branch
    %32 = sbr.rel (0) target = $region33
  $region32: #{_policy_net_pallas.1} parent=0 // pred_region
    _
  $region33: #{_policy_net_pallas.1} parent=0 // pred_fallthru
    _
  // Predicated region
  $region34: #{_policy_net_pallas.1} parent=0 // pred_check
    _
  $region35: #{_policy_net_pallas.1} parent=0 // pred_check_branch
    %34 = sbr.rel (0) target = $region37
  $region36: #{_policy_net_pallas.1} parent=0 // pred_region
    _
  $region37: #{_policy_net_pallas.1} parent=0 // pred_fallthru
    _
  // Predicated region
  $region38: #{_policy_net_pallas.1} parent=0 // pred_check
    _
  $region39: #{_policy_net_pallas.1} parent=0 // pred_check_branch
    %36 = sbr.rel (0) target = $region41
  $region40: #{_policy_net_pallas.1} parent=0 // pred_region
    _
  $region41: #{_policy_net_pallas.1} parent=0 // pred_fallthru
    _
  %v38 = vld [vmem:[%s0] sm:$0xff]
  %v39 = vpack.c.bf16 %v38, %v38
  %v40 = vld [vmem:[%s1] sm:$0xff]
  %v41 = vpack.c.bf16 %v40, %v40
  %v42 = vld [vmem:[%s3] sm:$0xf]
  %v43 = vld [vmem:[%s3 + $0x4] sm:$0x3]
  %v44 = vld [vmem:[%s4] sm:$0x3]
  %vm45 = vcmask 31744
  %v47 = vsel %vm45, %v41, 0
  %vm49 = vcmask 1041408
  %v51 = vsel %vm49, %v44, 0
  %53 = vmatprep.subr.bf16.mxu0 0
  %54 = vmatpush1.bf16.msra.mxu0 0
  %55 = vmatprep.subr.bf16.mxu0 0
  %56 = vmatpush1.bf16.msra.mxu0 0
  %57 = vmatprep.subr.bf16.mxu0 0
  %58 = vmatpush1.bf16.msra.mxu0 0
  %59 = vmatprep.subr.bf16.mxu0 0
  %60 = vmatpush1.bf16.msra.mxu0 0
  %61 = vmatprep.subr.bf16.mxu0 0
  %62 = vmatpush1.bf16.msra.mxu0 0
  %63 = vmatprep.subr.bf16.mxu0 0
  %64 = vmatpush1.bf16.msra.mxu0 0
  %65 = vmatprep.subr.bf16.mxu0 0
  %66 = vmatpush1.bf16.msra.mxu0 0
  %67 = vmatprep.subr.bf16.mxu0 0
  %68 = vmatpush1.bf16.msra.mxu0 %v51
  %69 = vmatprep.subr.bf16.mxu0 0
  %70 = vmatpush2.bf16.msra.mxu0 0
  %71 = vmatprep.subr.bf16.mxu0 0
  %72 = vmatpush2.bf16.msra.mxu0 0
  %73 = vmatprep.subr.bf16.mxu0 0
  %74 = vmatpush2.bf16.msra.mxu0 0
  %75 = vmatprep.subr.bf16.mxu0 0
  %76 = vmatpush2.bf16.msra.mxu0 0
  %77 = vmatprep.subr.bf16.mxu0 0
  %78 = vmatpush2.bf16.msra.mxu0 0
  %79 = vmatprep.subr.bf16.mxu0 0
  %80 = vmatpush2.bf16.msra.mxu0 0
  %81 = vmatprep.subr.bf16.mxu0 0
  %82 = vmatpush2.bf16.msra.mxu0 0
  %83 = vmatprep.subr.bf16.mxu0 0
  %84 = vmatpush2.bf16.msra.mxu0 0
  %85 = vmatprep.mubr.bf16.mxu0 0
  %86 = vmatmul.mubr.bf16.gmra.mxu0 %v47
  %v87 = vpop.f32.mrf.mxu0
  %v88 = vadd.f32 0.0, %v87
  %v89 = vpop.f32.mrf.mxu0
  %v90 = vpop.f32.mrf.mxu0
  %v91 = vpop.f32.mrf.mxu0
  %92 = vdwg.mxu0
  %v95 = vunpack.c.l.b16 %v42
  %v96 = vunpack.c.l.b16 %v43
  %v97 = vpack.c.b16 %v96, %v95
  %vm98 = vcmask 97280
  %v100 = vsel %vm98, %v39, 0
  %vm102 = vcmask 1045504
  %v104 = vsel %vm102, %v97, 0
  %106 = vmatprep.subr.bf16.mxu0 0
  %107 = vmatpush1.bf16.msra.mxu0 0
  %108 = vmatprep.subr.bf16.mxu0 0
  %109 = vmatpush1.bf16.msra.mxu0 0
  %110 = vmatprep.subr.bf16.mxu0 0
  %111 = vmatpush1.bf16.msra.mxu0 0
  %112 = vmatprep.subr.bf16.mxu0 0
  %113 = vmatpush1.bf16.msra.mxu0 0
  %114 = vmatprep.subr.bf16.mxu0 0
  %115 = vmatpush1.bf16.msra.mxu0 0
  %116 = vmatprep.subr.bf16.mxu0 0
  %117 = vmatpush1.bf16.msra.mxu0 0
  %118 = vmatprep.subr.bf16.mxu0 0
  %119 = vmatpush1.bf16.msra.mxu0 0
  %120 = vmatprep.subr.bf16.mxu0 0
  %121 = vmatpush1.bf16.msra.mxu0 %v104
  %122 = vmatprep.subr.bf16.mxu0 0
  %123 = vmatpush2.bf16.msra.mxu0 0
  %124 = vmatprep.subr.bf16.mxu0 0
  %125 = vmatpush2.bf16.msra.mxu0 0
  %126 = vmatprep.subr.bf16.mxu0 0
  %127 = vmatpush2.bf16.msra.mxu0 0
  %128 = vmatprep.subr.bf16.mxu0 0
  %129 = vmatpush2.bf16.msra.mxu0 0
  %130 = vmatprep.subr.bf16.mxu0 0
  %131 = vmatpush2.bf16.msra.mxu0 0
  %132 = vmatprep.subr.bf16.mxu0 0
  %133 = vmatpush2.bf16.msra.mxu0 0
  %134 = vmatprep.subr.bf16.mxu0 0
  %135 = vmatpush2.bf16.msra.mxu0 0
  %136 = vmatprep.subr.bf16.mxu0 0
  %137 = vmatpush2.bf16.msra.mxu0 0
  %138 = vmatprep.mubr.bf16.mxu0 0
  %139 = vmatmul.mubr.bf16.gmra.mxu0 %v100
  %v140 = vpop.f32.mrf.mxu0
  %v141 = vadd.f32 %v88, %v140
  %v142 = vpop.f32.mrf.mxu0
  %v143 = vpop.f32.mrf.mxu0
  %v144 = vpop.f32.mrf.mxu0
  %145 = vdwg.mxu0
  %v146 = vld [vmem:[%s5] sm:$0x1]
  %v148 = vlaneseq
  %v149 = vshrl.u32 %v148, 7
  %v150 = vsub.s32 0, %v149
  %v151 = vrot.slane %v146, %v150
  %v153 = vadd.f32 %v141, %v151
  %v154 = vmax.f32 %v153, 0.0
  %v155 = vpack.c.bf16 %v154, %v154
  %v156 = vld [vmem:[%s6] sm:$0xf]
  %v157 = vld [vmem:[%s6 + $0x4] sm:$0xf]
  %v158 = vld [vmem:[%s6 + $0x8] sm:$0xf]
  %v159 = vld [vmem:[%s6 + $0xc] sm:$0xf]
  %v160 = vld [vmem:[%s6 + $0x10] sm:$0xf]
  %v161 = vld [vmem:[%s6 + $0x14] sm:$0xf]
  %v162 = vld [vmem:[%s6 + $0x18] sm:$0xf]
  %v163 = vld [vmem:[%s6 + $0x1c] sm:$0xf]
  %v164 = vld [vmem:[%s6 + $0x20] sm:$0xf]
  %v165 = vld [vmem:[%s6 + $0x24] sm:$0xf]
  %v166 = vld [vmem:[%s6 + $0x28] sm:$0xf]
  %v167 = vld [vmem:[%s6 + $0x2c] sm:$0xf]
  %v168 = vld [vmem:[%s6 + $0x30] sm:$0xf]
  %v169 = vld [vmem:[%s6 + $0x34] sm:$0xf]
  %v170 = vld [vmem:[%s6 + $0x38] sm:$0xf]
  %v171 = vld [vmem:[%s6 + $0x3c] sm:$0xf]
  %v172 = vld [vmem:[%s7] sm:$0x1]
  %v174 = vlaneseq
  %v175 = vshrl.u32 %v174, 7
  %v176 = vsub.s32 0, %v175
  %v177 = vrot.slane %v172, %v176
  %v195 = vunpack.c.l.b16 %v156
  %v196 = vunpack.c.l.b16 %v157
  %v197 = vunpack.c.l.b16 %v158
  %v198 = vunpack.c.l.b16 %v159
  %v199 = vunpack.c.l.b16 %v160
  %v200 = vunpack.c.l.b16 %v161
  %v201 = vunpack.c.l.b16 %v162
  %v202 = vunpack.c.l.b16 %v163
  %v203 = vunpack.c.l.b16 %v164
  %v204 = vunpack.c.l.b16 %v165
  %v205 = vunpack.c.l.b16 %v166
  %v206 = vunpack.c.l.b16 %v167
  %v207 = vunpack.c.l.b16 %v168
  %v208 = vunpack.c.l.b16 %v169
  %v209 = vunpack.c.l.b16 %v170
  %v210 = vunpack.c.l.b16 %v171
  %v211 = vpack.c.b16 %v196, %v195
  %v212 = vpack.c.b16 %v198, %v197
  %v213 = vpack.c.b16 %v200, %v199
  %v214 = vpack.c.b16 %v202, %v201
  %v215 = vpack.c.b16 %v204, %v203
  %v216 = vpack.c.b16 %v206, %v205
  %v217 = vpack.c.b16 %v208, %v207
  %v218 = vpack.c.b16 %v210, %v209
  %227 = vmatprep.subr.bf16.mxu0 0
  %228 = vmatpush1.bf16.msra.mxu0 %v218
  %229 = vmatprep.subr.bf16.mxu0 0
  %230 = vmatpush1.bf16.msra.mxu0 %v217
  %231 = vmatprep.subr.bf16.mxu0 0
  %232 = vmatpush1.bf16.msra.mxu0 %v216
  %233 = vmatprep.subr.bf16.mxu0 0
  %234 = vmatpush1.bf16.msra.mxu0 %v215
  %235 = vmatprep.subr.bf16.mxu0 0
  %236 = vmatpush1.bf16.msra.mxu0 %v214
  %237 = vmatprep.subr.bf16.mxu0 0
  %238 = vmatpush1.bf16.msra.mxu0 %v213
  %239 = vmatprep.subr.bf16.mxu0 0
  %240 = vmatpush1.bf16.msra.mxu0 %v212
  %241 = vmatprep.subr.bf16.mxu0 0
  %242 = vmatpush1.bf16.msra.mxu0 %v211
  %243 = vmatprep.subr.bf16.mxu0 0
  %244 = vmatpush2.bf16.msra.mxu0 0
  %245 = vmatprep.subr.bf16.mxu0 0
  %246 = vmatpush2.bf16.msra.mxu0 0
  %247 = vmatprep.subr.bf16.mxu0 0
  %248 = vmatpush2.bf16.msra.mxu0 0
  %249 = vmatprep.subr.bf16.mxu0 0
  %250 = vmatpush2.bf16.msra.mxu0 0
  %251 = vmatprep.subr.bf16.mxu0 0
  %252 = vmatpush2.bf16.msra.mxu0 0
  %253 = vmatprep.subr.bf16.mxu0 0
  %254 = vmatpush2.bf16.msra.mxu0 0
  %255 = vmatprep.subr.bf16.mxu0 0
  %256 = vmatpush2.bf16.msra.mxu0 0
  %257 = vmatprep.subr.bf16.mxu0 0
  %258 = vmatpush2.bf16.msra.mxu0 0
  %259 = vmatprep.mubr.bf16.mxu0 0
  %260 = vmatmul.mubr.bf16.gmra.mxu0 %v155
  %v261 = vpop.f32.mrf.mxu0
  %v262 = vadd.f32 %v177, %v261
  %v263 = vpop.f32.mrf.mxu0
  %v264 = vpop.f32.mrf.mxu0
  %v265 = vpop.f32.mrf.mxu0
  %266 = vdwg.mxu0
  %v267 = vmax.f32 %v262, 0.0
  %v268 = vpack.c.bf16 %v267, %v267
  %v269 = vld [vmem:[%s8] sm:$0xf]
  %v270 = vld [vmem:[%s8 + $0x4] sm:$0xf]
  %v271 = vld [vmem:[%s8 + $0x8] sm:$0xf]
  %v272 = vld [vmem:[%s8 + $0xc] sm:$0xf]
  %v273 = vld [vmem:[%s8 + $0x10] sm:$0xf]
  %v274 = vld [vmem:[%s8 + $0x14] sm:$0xf]
  %v275 = vld [vmem:[%s8 + $0x18] sm:$0xf]
  %v276 = vld [vmem:[%s8 + $0x1c] sm:$0xf]
  %v277 = vld [vmem:[%s8 + $0x20] sm:$0xf]
  %v278 = vld [vmem:[%s8 + $0x24] sm:$0xf]
  %v279 = vld [vmem:[%s8 + $0x28] sm:$0xf]
  %v280 = vld [vmem:[%s8 + $0x2c] sm:$0xf]
  %v281 = vld [vmem:[%s8 + $0x30] sm:$0xf]
  %v282 = vld [vmem:[%s8 + $0x34] sm:$0xf]
  %v283 = vld [vmem:[%s8 + $0x38] sm:$0xf]
  %v284 = vld [vmem:[%s8 + $0x3c] sm:$0xf]
  %v285 = vld [vmem:[%s9] sm:$0x1]
  %v287 = vlaneseq
  %v288 = vshrl.u32 %v287, 7
  %v289 = vsub.s32 0, %v288
  %v290 = vrot.slane %v285, %v289
  %v308 = vunpack.c.l.b16 %v269
  %v309 = vunpack.c.l.b16 %v270
  %v310 = vunpack.c.l.b16 %v271
  %v311 = vunpack.c.l.b16 %v272
  %v312 = vunpack.c.l.b16 %v273
  %v313 = vunpack.c.l.b16 %v274
  %v314 = vunpack.c.l.b16 %v275
  %v315 = vunpack.c.l.b16 %v276
  %v316 = vunpack.c.l.b16 %v277
  %v317 = vunpack.c.l.b16 %v278
  %v318 = vunpack.c.l.b16 %v279
  %v319 = vunpack.c.l.b16 %v280
  %v320 = vunpack.c.l.b16 %v281
  %v321 = vunpack.c.l.b16 %v282
  %v322 = vunpack.c.l.b16 %v283
  %v323 = vunpack.c.l.b16 %v284
  %v324 = vpack.c.b16 %v309, %v308
  %v325 = vpack.c.b16 %v311, %v310
  %v326 = vpack.c.b16 %v313, %v312
  %v327 = vpack.c.b16 %v315, %v314
  %v328 = vpack.c.b16 %v317, %v316
  %v329 = vpack.c.b16 %v319, %v318
  %v330 = vpack.c.b16 %v321, %v320
  %v331 = vpack.c.b16 %v323, %v322
  %340 = vmatprep.subr.bf16.mxu0 0
  %341 = vmatpush1.bf16.msra.mxu0 %v331
  %342 = vmatprep.subr.bf16.mxu0 0
  %343 = vmatpush1.bf16.msra.mxu0 %v330
  %344 = vmatprep.subr.bf16.mxu0 0
  %345 = vmatpush1.bf16.msra.mxu0 %v329
  %346 = vmatprep.subr.bf16.mxu0 0
  %347 = vmatpush1.bf16.msra.mxu0 %v328
  %348 = vmatprep.subr.bf16.mxu0 0
  %349 = vmatpush1.bf16.msra.mxu0 %v327
  %350 = vmatprep.subr.bf16.mxu0 0
  %351 = vmatpush1.bf16.msra.mxu0 %v326
  %352 = vmatprep.subr.bf16.mxu0 0
  %353 = vmatpush1.bf16.msra.mxu0 %v325
  %354 = vmatprep.subr.bf16.mxu0 0
  %355 = vmatpush1.bf16.msra.mxu0 %v324
  %356 = vmatprep.subr.bf16.mxu0 0
  %357 = vmatpush2.bf16.msra.mxu0 0
  %358 = vmatprep.subr.bf16.mxu0 0
  %359 = vmatpush2.bf16.msra.mxu0 0
  %360 = vmatprep.subr.bf16.mxu0 0
  %361 = vmatpush2.bf16.msra.mxu0 0
  %362 = vmatprep.subr.bf16.mxu0 0
  %363 = vmatpush2.bf16.msra.mxu0 0
  %364 = vmatprep.subr.bf16.mxu0 0
  %365 = vmatpush2.bf16.msra.mxu0 0
  %366 = vmatprep.subr.bf16.mxu0 0
  %367 = vmatpush2.bf16.msra.mxu0 0
  %368 = vmatprep.subr.bf16.mxu0 0
  %369 = vmatpush2.bf16.msra.mxu0 0
  %370 = vmatprep.subr.bf16.mxu0 0
  %371 = vmatpush2.bf16.msra.mxu0 0
  %372 = vmatprep.mubr.bf16.mxu0 0
  %373 = vmatmul.mubr.bf16.gmra.mxu0 %v268
  %v374 = vpop.f32.mrf.mxu0
  %v375 = vadd.f32 %v290, %v374
  %v376 = vpop.f32.mrf.mxu0
  %v377 = vpop.f32.mrf.mxu0
  %v378 = vpop.f32.mrf.mxu0
  %379 = vdwg.mxu0
  %vm380 = vcmask 48128
  %v381 = vsel %vm380, %v375, -inf
  %382 = vmax.xlane.f32.xlu0 %v381
  %v383 = vpop.xlane.xlu0 %382
  %v384 = vsub.f32 %v375, %v383
  %v385 = vmul.f32 %v384, 1.442695
  %v386 = vpow.pop %v385
  %v387 = vsel %vm380, %v386, 0.0
  %388 = vadd.xlane.f32.xlu0 %v387
  %v389 = vpop.xlane.xlu0 %388
  %v390 = vlog2.pop %v389
  %v391 = vmul.f32 %v390, 0.6931472
  %v392 = vadd.f32 %v383, %v391
  %v393 = vsub.f32 %v375, %v392
  %v394 = vld [vmem:[%s2] sm:$0xff]
  %v395 = vadd.f32 %v375, %v394
  %v396 = vsel %vm380, %v395, -inf
  %397 = vmax.xlane.f32.xlu0 %v396
  %v398 = vpop.xlane.xlu0 %397
  %v399 = vlaneseq
  %v400 = vand.u32 %v399, 127
  %vm401 = vcmp.ge.f32.partialorder %v395, %v398
  %v402 = vsel %vm401, %v400, 6
  %v403 = vsel %vm380, %v402, 2147483647
  %v404 = vand.u32 %v403, 65535
  %v405 = vshra.s32 %v403, 16
  %v406 = vcvt.s32.f32 %v404
  %v407 = vcvt.s32.f32 %v405
  %408 = vmin.xlane.f32.xlu0 %v407
  %v409 = vpop.xlane.xlu0 %408
  %vm410 = vcmp.eq.f32.partialorder %v407, %v409
  %v411 = vsel %vm410, %v406, inf
  %412 = vmin.xlane.f32.xlu0 %v411
  %v413 = vpop.xlane.xlu0 %412
  %v414 = vcvt.f32.s32 %v413
  %v415 = vcvt.f32.s32 %v409
  %v416 = vshll.u32 %v415, 16
  %v417 = vadd.s32 %v416, %v414
  %vm418 = vcmp.eq.s32.totalorder %v400, %v417
  %v419 = vsel %vm418, %v393, 0.0
  %v420 = vsel %vm380, %v419, 0.0
  %421 = vadd.xlane.f32.xlu0 %v420
  %v422 = vpop.xlane.xlu0 %421
  %vm423 = vcmask 7168
  %424 = vst.msk [vmem:[%s10] sm:$0xff] %vm423, %v417
  %425 = vst.msk [vmem:[%s11] sm:$0xff] %vm423, %v422
  // Predicated region
  $region42: #{_policy_net_pallas.1} parent=0 // pred_check
    _
  $region43: #{_policy_net_pallas.1} parent=0 // pred_check_branch
    %427 = sbr.rel (0) target = $region45
  $region44: #{_policy_net_pallas.1} parent=0 // pred_region
    _
  $region45: #{_policy_net_pallas.1} parent=0 // pred_fallthru
    _
  // Predicated region
  $region46: #{_policy_net_pallas.1} parent=0 // pred_check
    _
  $region47: #{_policy_net_pallas.1} parent=0 // pred_check_branch
    %429 = sbr.rel (0) target = $region49
  $region48: #{_policy_net_pallas.1} parent=0 // pred_region
    _
  $region49: #{_policy_net_pallas.1} parent=0 // pred_fallthru
    _
  // Predicated region
  $region50: #{_policy_net_pallas.1} parent=0 // pred_check
    _
  $region51: #{_policy_net_pallas.1} parent=0 // pred_check_branch
    %431 = sbr.rel (0) target = $region53
  $region52: #{_policy_net_pallas.1} parent=0 // pred_region
    _
  $region53: #{_policy_net_pallas.1} parent=0 // pred_fallthru
    _
  // Predicated region
  $region54: #{_policy_net_pallas.1} parent=0 // pred_check
    _
  $region55: #{_policy_net_pallas.1} parent=0 // pred_check_branch
    %433 = sbr.rel (0) target = $region57
  $region56: #{_policy_net_pallas.1} parent=0 // pred_region
    _
  $region57: #{_policy_net_pallas.1} parent=0 // pred_fallthru
    _

</llo_original>
